<compile_context>
chip_gen: v5e
topology: v5e:2x2
jax: 0.10.0
libtpu: 0.0.40
codegen_flags: <defaults>
</compile_context>

<pallas_src>
from functools import partial

import jax
import jax.numpy as jnp
from jax.experimental import pallas as pl
from jax.experimental.pallas import tpu as pltpu


def transition_kernel(x_ref, w_ref, scale_ref, shift_ref, o_ref):
    """Fused BN affine + ReLU + 2x2 window sum + 1x1 conv (MXU matmul, f32 accumulate)."""
    scale = scale_ref[0]                               # (Cin_p,) compute dtype
    shift = shift_ref[0]

    x = x_ref[0]                                       # (tR, 4, W2, Cin_p) compute dtype
    h = jnp.maximum(x * scale + shift, 0.0)            # BN affine + ReLU (compute dtype)
    pooled = jnp.sum(h, axis=1)                        # 2x2 window SUM; 1/4 folded into the weight

    tr, w2, cin = pooled.shape
    y = jnp.dot(pooled.reshape(tr * w2, cin), w_ref[...],
                preferred_element_type=jnp.float32)    # (tR*W2, Cout_pad) f32 accumulation
    cout = o_ref.shape[-1]                             # unpadded Cout in HBM
    o_ref[0] = y.reshape(tr, w2, -1)[..., :cout].astype(o_ref.dtype)


def _pick_row_tile(h2, per_row_bytes, fixed_bytes, n_batch, target_bytes=12 << 20, min_steps=8):
    """Largest divisor of H2 whose full per-step VMEM footprint stays under the budget, shrunk (if
    possible) so the grid has >= min_steps steps (>= 4 pipelined steps per v7x TensorCore)."""
    divisors = [d for d in range(1, h2 + 1) if h2 % d == 0]
    fitting = [d for d in divisors if fixed_bytes + d * per_row_bytes <= target_bytes] or [1]
    t = max(fitting)
    while t > 1 and n_batch * (h2 // t) < min_steps:
        smaller = [d for d in fitting if d < t]
        if not smaller:
            break
        t = max(smaller)
    return t


@partial(jax.jit, static_argnames=("compute_dtype",))
def transition_block(x_nchw, conv_w, gamma, beta, eps=1e-5, compute_dtype=jnp.bfloat16):
    N, Cin, H, W = x_nchw.shape
    Cout = conv_w.shape[0]
    # TODO(synk): odd H/W (AvgPool2d floor semantics) not handled; assuming even spatial dims.
    assert H % 2 == 0 and W % 2 == 0, "TransitionBlock kernel assumes even H and W"
    H2, W2 = H // 2, W // 2

    # Lane padding: Cout padded only for the MXU N dim (never materialized in HBM); Cin padded only
    # when the relative overhead is small (<= 12.5%), so small Cin doesn't blow up HBM traffic.
    Cout_pad = ((Cout + 127) // 128) * 128
    cin_rounded = ((Cin + 127) // 128) * 128
    Cin_p = cin_rounded if (cin_rounded - Cin) * 8 <= Cin else Cin

    # ---- BN batch statistics: jnp reductions over the original f32 input (XLA fuses this read with
    #      the layout transpose below, so xk is never re-read for stats). ----
    xf = x_nchw.astype(jnp.float32)
    cnt = jnp.float32(N * H * W)
    s1 = jnp.sum(xf, axis=(0, 2, 3))
    s2 = jnp.sum(xf * xf, axis=(0, 2, 3))
    mean = s1 / cnt
    var = jnp.maximum(s2 / cnt - mean * mean, 0.0)      # biased variance (training-mode BN)
    inv_std = gamma.astype(jnp.float32) / jnp.sqrt(var + eps)
    scale = inv_std
    shift = beta.astype(jnp.float32) - mean * inv_std
    if Cin_p != Cin:
        scale = jnp.pad(scale, (0, Cin_p - Cin))        # padded channels: scale=shift=0 -> h=0
        shift = jnp.pad(shift, (0, Cin_p - Cin))
    scale = scale.reshape(1, Cin_p).astype(compute_dtype)
    shift = shift.reshape(1, Cin_p).astype(compute_dtype)

    # ---- Single layout pass: NCHW -> (N, H2, 4, W2, Cin_p) in the HBM/MXU dtype.  The "4" axis holds
    #      the 2x2 pooling-window offsets so the in-kernel pool is a free sum over a leading axis. ----
    xc = x_nchw if Cin_p == Cin else jnp.pad(x_nchw, ((0, 0), (0, Cin_p - Cin), (0, 0), (0, 0)))
    xk = (xc.reshape(N, Cin_p, H2, 2, W2, 2)
            .transpose(0, 2, 3, 5, 4, 1)                # (N, H2, 2, 2, W2, Cin_p)
            .reshape(N, H2, 4, W2, Cin_p)
            .astype(compute_dtype))

    # Conv2d weight (Cout, Cin, 1, 1) -> (Cin_p, Cout_pad); fold the 1/4 avg-pool factor in.
    w = conv_w.reshape(Cout, Cin).T.astype(jnp.float32) * 0.25
    w = jnp.pad(w, ((0, Cin_p - Cin), (0, Cout_pad - Cout))).astype(compute_dtype)

    # ---- Tile selection: budget the full per-step VMEM footprint, keep >= 8 grid steps. ----
    itemsize = jnp.dtype(compute_dtype).itemsize
    per_row = (2 * 4 * W2 * Cin_p * itemsize            # double-buffered input block
               + 4 * W2 * Cin_p * itemsize              # h intermediate
               + W2 * Cin_p * itemsize                  # pooled
               + W2 * Cout_pad * 4                      # f32 matmul result
               + 2 * W2 * Cout * itemsize)              # double-buffered output block
    fixed = (Cin_p * Cout_pad + 2 * Cin_p) * itemsize   # resident weight + scale/shift
    tR = _pick_row_tile(H2, per_row, fixed, N)
    grid = (N, H2 // tR)

    flops = 2 * N * H2 * W2 * Cin_p * Cout_pad + 6 * N * H2 * 4 * W2 * Cin_p
    bytes_accessed = (xk.size * itemsize + w.size * itemsize
                      + 2 * Cin_p * itemsize + N * H2 * W2 * Cout * itemsize)

    out = pl.pallas_call(
        transition_kernel,
        out_shape=jax.ShapeDtypeStruct((N, H2, W2, Cout), compute_dtype),
        grid=grid,
        in_specs=[
            pl.BlockSpec((1, tR, 4, W2, Cin_p), lambda n, r: (n, r, 0, 0, 0)),
            pl.BlockSpec((Cin_p, Cout_pad), lambda n, r: (0, 0)),
            pl.BlockSpec((1, Cin_p), lambda n, r: (0, 0)),
            pl.BlockSpec((1, Cin_p), lambda n, r: (0, 0)),
        ],
        out_specs=pl.BlockSpec((1, tR, W2, Cout), lambda n, r: (n, r, 0, 0)),
        compiler_params=pltpu.CompilerParams(
            dimension_semantics=("parallel", "parallel"),
            vmem_limit_bytes=32 * 1024 * 1024),
        cost_estimate=pl.CostEstimate(flops=flops, transcendentals=0,
                                      bytes_accessed=bytes_accessed),
    )(xk, w, scale, shift)

    # Back to the module's NCHW (N, Cout, H/2, W/2) contract; the slice/pad never hits HBM, and the
    # transpose reads a small unpadded compute_dtype array.
    return jnp.transpose(out, (0, 3, 1, 2)).astype(x_nchw.dtype)


def transition_ref(x, conv_w, gamma, beta, eps=1e-5):
    """Pure-JAX reference matching the PyTorch forward (training-mode BN)."""
    mean = jnp.mean(x, axis=(0, 2, 3), keepdims=True)
    var = jnp.var(x, axis=(0, 2, 3), keepdims=True)
    xn = (x - mean) / jnp.sqrt(var + eps)
    xn = xn * gamma.reshape(1, -1, 1, 1) + beta.reshape(1, -1, 1, 1)
    h = jnp.maximum(xn, 0.0)
    w2d = conv_w.reshape(conv_w.shape[0], conv_w.shape[1])
    y = jnp.einsum('nchw,oc->nohw', h, w2d)
    n, co, hh, ww = y.shape
    return y.reshape(n, co, hh // 2, 2, ww // 2, 2).mean(axis=(3, 5))


if __name__ == "__main__":
    key = jax.random.PRNGKey(0)
    k1, k2, k3, k4 = jax.random.split(key, 4)

    # Small shapes consistent with the module: batch=2, input_size=4, output_size=2, 16x16 spatial
    N, Cin, Cout, H, W = 2, 4, 2, 16, 16
    x = jax.random.normal(k1, (N, Cin, H, W), jnp.float32)
    conv_w = jax.random.normal(k2, (Cout, Cin, 1, 1), jnp.float32) * 0.1   # Conv2d weight, bias=False
    gamma = 1.0 + 0.1 * jax.random.normal(k3, (Cin,), jnp.float32)         # BN weight
    beta = 0.1 * jax.random.normal(k4, (Cin,), jnp.float32)                # BN bias

    ref = transition_ref(x, conv_w, gamma, beta)

    # Exact f32 path: verifies the kernel math at tight tolerance (also the v5e-recommended path).
    out_f32 = jax.block_until_ready(transition_block(x, conv_w, gamma, beta, compute_dtype=jnp.float32))
    assert out_f32.shape == (N, Cout, H // 2, W // 2), out_f32.shape
    assert jnp.allclose(out_f32, ref, atol=5e-5, rtol=5e-5), float(jnp.max(jnp.abs(out_f32 - ref)))

    # Default perf path (v6e/v7x): bf16 activations/weights/elementwise, f32 stats and MXU accumulation.
    out_bf16 = jax.block_until_ready(transition_block(x, conv_w, gamma, beta))
    assert out_bf16.shape == (N, Cout, H // 2, W // 2), out_bf16.shape
    assert jnp.allclose(out_bf16, ref, atol=5e-2, rtol=5e-2), float(jnp.max(jnp.abs(out_bf16 - ref)))

    print("KERNEL_OK")
</pallas_src>

<mosaic_0001>
module attributes {stable_mosaic.version = 11 : i64} {
  func.func @transition_kernel(%arg0: i32, %arg1: i32, %arg2: memref<1x2x4x8x4xf32, #tpu.memory_space<vmem>>, %arg3: memref<4x128xf32, #tpu.memory_space<vmem>>, %arg4: memref<1x4xf32, #tpu.memory_space<vmem>>, %arg5: memref<1x4xf32, #tpu.memory_space<vmem>>, %arg6: memref<1x2x8x2xf32, #tpu.memory_space<vmem>>) attributes {dimension_semantics = [#tpu.dimension_semantics<parallel>, #tpu.dimension_semantics<parallel>], iteration_bounds = array<i64: 2, 4>, scalar_prefetch = 0 : i64, scratch_operands = 0 : i64, tpu.core_type = #tpu.core_type<tc>, window_params = [{transform_indices = @transform_0, window_bounds = array<i64: 1, 2, 4, 8, 4>}, {pipeline_mode = #tpu.pipeline_mode<synchronous>, transform_indices = @transform_1, window_bounds = array<i64: 4, 128>}, {pipeline_mode = #tpu.pipeline_mode<synchronous>, transform_indices = @transform_2, window_bounds = array<i64: 1, 4>}, {pipeline_mode = #tpu.pipeline_mode<synchronous>, transform_indices = @transform_3, window_bounds = array<i64: 1, 4>}, {transform_indices = @transform_4, window_bounds = array<i64: 1, 2, 8, 2>}]} {
    %c0 = arith.constant 0 : index
    %c0_0 = arith.constant 0 : index
    %0 = vector.load %arg4[%c0, %c0_0] : memref<1x4xf32, #tpu.memory_space<vmem>>, vector<1x4xf32>
    %1 = vector.shape_cast %0 : vector<1x4xf32> to vector<4xf32>
    %c0_1 = arith.constant 0 : index
    %c0_2 = arith.constant 0 : index
    %2 = vector.load %arg5[%c0_1, %c0_2] : memref<1x4xf32, #tpu.memory_space<vmem>>, vector<1x4xf32>
    %3 = vector.shape_cast %2 : vector<1x4xf32> to vector<4xf32>
    %c0_3 = arith.constant 0 : index
    %c0_4 = arith.constant 0 : index
    %c0_5 = arith.constant 0 : index
    %c0_6 = arith.constant 0 : index
    %c0_7 = arith.constant 0 : index
    %4 = vector.load %arg2[%c0_3, %c0_4, %c0_5, %c0_6, %c0_7] : memref<1x2x4x8x4xf32, #tpu.memory_space<vmem>>, vector<1x2x4x8x4xf32>
    %5 = vector.shape_cast %4 : vector<1x2x4x8x4xf32> to vector<2x4x8x4xf32>
    %6 = vector.shape_cast %1 : vector<4xf32> to vector<1x1x1x4xf32>
    %7 = vector.broadcast %6 : vector<1x1x1x4xf32> to vector<2x4x8x4xf32>
    %8 = arith.mulf %5, %7 : vector<2x4x8x4xf32>
    %9 = vector.shape_cast %3 : vector<4xf32> to vector<1x1x1x4xf32>
    %10 = vector.broadcast %9 : vector<1x1x1x4xf32> to vector<2x4x8x4xf32>
    %11 = arith.addf %8, %10 : vector<2x4x8x4xf32>
    %cst = arith.constant 0.000000e+00 : f32
    %12 = vector.broadcast %cst : f32 to vector<2x4x8x4xf32>
    %13 = arith.maximumf %11, %12 : vector<2x4x8x4xf32>
    %cst_8 = arith.constant dense<0.000000e+00> : vector<2x8x4xf32>
    %14 = vector.multi_reduction <add>, %13, %cst_8 [1] : vector<2x4x8x4xf32> to vector<2x8x4xf32>
    %15 = vector.shape_cast %14 : vector<2x8x4xf32> to vector<16x4xf32>
    %c0_9 = arith.constant 0 : index
    %c0_10 = arith.constant 0 : index
    %16 = vector.load %arg3[%c0_9, %c0_10] : memref<4x128xf32, #tpu.memory_space<vmem>>, vector<4x128xf32>
    %cst_11 = arith.constant dense<0.000000e+00> : vector<16x128xf32>
    %17 = tpu.matmul %15, %16, %cst_11 {dimension_numbers = #tpu.dot_dimension_numbers<[1], [0], [0], [1], [0, 0, 1, 1], [], []>} : vector<16x4xf32>, vector<4x128xf32>, vector<16x128xf32> -> vector<16x128xf32>
    %18 = vector.shape_cast %17 : vector<16x128xf32> to vector<2x8x128xf32>
    %19 = vector.extract_strided_slice %18 {offsets = [0, 0, 0], sizes = [2, 8, 2], strides = [1, 1, 1]} : vector<2x8x128xf32> to vector<2x8x2xf32>
    %c0_12 = arith.constant 0 : index
    %c0_13 = arith.constant 0 : index
    %c0_14 = arith.constant 0 : index
    %c0_15 = arith.constant 0 : index
    %20 = vector.load %arg6[%c0_12, %c0_13, %c0_14, %c0_15] : memref<1x2x8x2xf32, #tpu.memory_space<vmem>>, vector<1x2x8x2xf32>
    %21 = vector.shape_cast %20 : vector<1x2x8x2xf32> to vector<2x8x2xf32>
    %22 = vector.shape_cast %19 : vector<2x8x2xf32> to vector<1x2x8x2xf32>
    tpu.vector_store %arg6[%c0_12, %c0_13, %c0_14, %c0_15], %22 {strides = array<i32>} : memref<1x2x8x2xf32, #tpu.memory_space<vmem>>, vector<1x2x8x2xf32>,
    return
  }
  func.func @transform_0(%arg0: i32, %arg1: i32) -> (i32, i32, i32, i32, i32) {
    %c0_i32 = arith.constant 0 : i32
    %c0_i32_0 = arith.constant 0 : i32
    %c0_i32_1 = arith.constant 0 : i32
    %c0_i32_2 = arith.constant 0 : i32
    return %arg0, %arg1, %c0_i32, %c0_i32_0, %c0_i32_1 : i32, i32, i32, i32, i32
  }
  func.func @transform_1(%arg0: i32, %arg1: i32) -> (i32, i32) {
    %c0_i32 = arith.constant 0 : i32
    %c0_i32_0 = arith.constant 0 : i32
    %c0_i32_1 = arith.constant 0 : i32
    return %c0_i32, %c0_i32_0 : i32, i32
  }
  func.func @transform_2(%arg0: i32, %arg1: i32) -> (i32, i32) {
    %c0_i32 = arith.constant 0 : i32
    %c0_i32_0 = arith.constant 0 : i32
    %c0_i32_1 = arith.constant 0 : i32
    return %c0_i32, %c0_i32_0 : i32, i32
  }
  func.func @transform_3(%arg0: i32, %arg1: i32) -> (i32, i32) {
    %c0_i32 = arith.constant 0 : i32
    %c0_i32_0 = arith.constant 0 : i32
    %c0_i32_1 = arith.constant 0 : i32
    return %c0_i32, %c0_i32_0 : i32, i32
  }
  func.func @transform_4(%arg0: i32, %arg1: i32) -> (i32, i32, i32, i32) {
    %c0_i32 = arith.constant 0 : i32
    %c0_i32_0 = arith.constant 0 : i32
    %c0_i32_1 = arith.constant 0 : i32
    return %arg0, %arg1, %c0_i32, %c0_i32_0 : i32, i32, i32, i32
  }
}

</mosaic_0001>

<llo_original>
// kernel: transition_block.1
$region0: #{transition_block.1}
  #allocation0 [shape = 'u32[]', space=smem, size = 0x4, offset = 0x4, fixed_abs, tag = 'smem constant byte address 0x4 - core index']
  #allocation1 [shape = 'u32[72,128]{1,0:T(1,128)}', space=vmem, size = 0x9000, scoped, tag = 'internal scratch']
  %s0 = inlined_call_operand.vmem [shape: f32[2,8,4,8,4], index: 0, kind: input, shape index: {}]
  %s1 = inlined_call_operand.vmem [shape: f32[4,128], index: 1, kind: input, shape index: {}]
  %s2 = inlined_call_operand.vmem [shape: f32[1,4], index: 2, kind: input, shape index: {}]
  %s3 = inlined_call_operand.vmem [shape: f32[1,4], index: 3, kind: input, shape index: {}]
  %s4 = inlined_call_operand.vmem [shape: f32[2,8,8,2], index: 4, kind: output, shape index: {}]
  %s5 = sld [smem:[#allocation0]]
  $region49: #{transition_block.1} parent=0
    _
  %s7 = ssub.s32 1, %s5
  %s8 = scalar_select 0, %s7, %s5
  loop: start=0, step=1, limit=10
  $region2: #{transition_block.1} parent=0 // loop_pre_header
    _
  $region3: #{transition_block.1} parent=0 // loop_header
    %s10 = sphi 0, %s14
    %p11 = scmp.ge.s32.totalorder %s10, 10
    %s17 = sphi 0, %s29
    %s18 = sphi 0, %s25
    %s19 = sphi 0, %s17
    %s20 = sphi 0, %s18
    %s21 = sphi 0, %s19
    %s22 = sphi 0, %s20
    %s34 = sphi 0, %s36
    %s37 = sphi 0, %s34
    %s38 = sphi 0, %s37
    %s54 = sphi 0, %s38
    %s58 = sphi 0, %s58
    %s60 = sphi 0, %s58
    %s61 = sphi 0, %s60
    %s75 = sphi 0, %s61
    %s79 = sphi 0, %s79
    %s81 = sphi 0, %s79
    %s82 = sphi 0, %s81
    %s96 = sphi 0, %s82
    %s100 = sphi 0, %s100
    %s102 = sphi 0, %s100
    %s103 = sphi 0, %s102
    %s117 = sphi 0, %s103
    %s125 = sphi 0, %s127
    %s128 = sphi 0, %s125
    %s129 = sphi 0, %s128
    %s145 = sphi 0, %s129
  $region4: #{transition_block.1} parent=0 // loop_header_branch
    %13 = sbr.rel (%p11) target = $region8
  $region5: #{transition_block.1} parent=0 // loop_body
    %s15 = ssub.s32 %s10, 1
    %s16 = ssub.s32 %s10, 2
    %s23 = sadd.s32 1, %s18
    %p24 = scmp.ge.s32.totalorder %s23, 4
    %s25 = scalar_select %p24, 0, %s23
    %s26 = sadd.s32 1, %s17
    %s27 = scalar_select %p24, %s26, %s17
    %p28 = scmp.ge.s32.totalorder %s27, 2
    %s29 = scalar_select %p28, 0, %s27
    %s30 = ssub.s32 %s17, %s29
    %s31 = ssub.s32 %s18, %s25
    %s32 = sor.u32 %s30, %s31
    %p33 = scmp.eq.s32.totalorder %s32, 0
    %s35 = sadd.s32 %s34, 1
    %s36 = scalar_select %p33, %s34, %s35
    %p39 = pneg %p33
    %p40 = scmp.eq.s32.totalorder %s10, 7
    %p41 = por %p39, %p40
    %p42 = scmp.ne.s32.totalorder %s34, %s37
    %p43 = scmp.eq.s32.totalorder %s10, 0
    %p44 = por %p42, %p43
    %p45 = scmp.ne.s32.totalorder %s34, %s37
    %p46 = scmp.eq.s32.totalorder %s15, 7
    %p47 = por %p45, %p46
    %p48 = scmp.ne.s32.totalorder %s37, %s38
    %p49 = scmp.eq.s32.totalorder %s15, 0
    %p50 = por %p48, %p49
    %p51 = scmp.ne.s32.totalorder %s37, %s38
    %p52 = scmp.eq.s32.totalorder %s16, 7
    %p53 = por %p51, %p52
    %p55 = scmp.ne.s32.totalorder %s38, %s54
    %p56 = scmp.eq.s32.totalorder %s16, 0
    %p57 = por %p55, %p56
    %s59 = sadd.s32 %s58, 1
    %p62 = scmp.eq.s32.totalorder %s10, 7
    %p63 = scmp.ne.s32.totalorder %s58, %s60
    %p64 = scmp.eq.s32.totalorder %s10, 0
    %p65 = por %p63, %p64
    %p66 = scmp.ne.s32.totalorder %s58, %s60
    %p67 = scmp.eq.s32.totalorder %s15, 7
    %p68 = por %p66, %p67
    %p69 = scmp.ne.s32.totalorder %s60, %s61
    %p70 = scmp.eq.s32.totalorder %s15, 0
    %p71 = por %p69, %p70
    %p72 = scmp.ne.s32.totalorder %s60, %s61
    %p73 = scmp.eq.s32.totalorder %s16, 7
    %p74 = por %p72, %p73
    %p76 = scmp.ne.s32.totalorder %s61, %s75
    %p77 = scmp.eq.s32.totalorder %s16, 0
    %p78 = por %p76, %p77
    %s80 = sadd.s32 %s79, 1
    %p83 = scmp.eq.s32.totalorder %s10, 7
    %p84 = scmp.ne.s32.totalorder %s79, %s81
    %p85 = scmp.eq.s32.totalorder %s10, 0
    %p86 = por %p84, %p85
    %p87 = scmp.ne.s32.totalorder %s79, %s81
    %p88 = scmp.eq.s32.totalorder %s15, 7
    %p89 = por %p87, %p88
    %p90 = scmp.ne.s32.totalorder %s81, %s82
    %p91 = scmp.eq.s32.totalorder %s15, 0
    %p92 = por %p90, %p91
    %p93 = scmp.ne.s32.totalorder %s81, %s82
    %p94 = scmp.eq.s32.totalorder %s16, 7
    %p95 = por %p93, %p94
    %p97 = scmp.ne.s32.totalorder %s82, %s96
    %p98 = scmp.eq.s32.totalorder %s16, 0
    %p99 = por %p97, %p98
    %s101 = sadd.s32 %s100, 1
    %p104 = scmp.eq.s32.totalorder %s10, 7
    %p105 = scmp.ne.s32.totalorder %s100, %s102
    %p106 = scmp.eq.s32.totalorder %s10, 0
    %p107 = por %p105, %p106
    %p108 = scmp.ne.s32.totalorder %s100, %s102
    %p109 = scmp.eq.s32.totalorder %s15, 7
    %p110 = por %p108, %p109
    %p111 = scmp.ne.s32.totalorder %s102, %s103
    %p112 = scmp.eq.s32.totalorder %s15, 0
    %p113 = por %p111, %p112
    %p114 = scmp.ne.s32.totalorder %s102, %s103
    %p115 = scmp.eq.s32.totalorder %s16, 7
    %p116 = por %p114, %p115
    %p118 = scmp.ne.s32.totalorder %s103, %s117
    %p119 = scmp.eq.s32.totalorder %s16, 0
    %p120 = por %p118, %p119
    %s121 = ssub.s32 %s17, %s29
    %s122 = ssub.s32 %s18, %s25
    %s123 = sor.u32 %s121, %s122
    %p124 = scmp.eq.s32.totalorder %s123, 0
    %s126 = sadd.s32 %s125, 1
    %s127 = scalar_select %p124, %s125, %s126
    %p130 = pneg %p124
    %p131 = scmp.eq.s32.totalorder %s10, 7
    %p132 = por %p130, %p131
    %p133 = scmp.ne.s32.totalorder %s125, %s128
    %p134 = scmp.eq.s32.totalorder %s10, 0
    %p135 = por %p133, %p134
    %p136 = scmp.ne.s32.totalorder %s125, %s128
    %p137 = scmp.eq.s32.totalorder %s15, 7
    %p138 = por %p136, %p137
    %p139 = scmp.ne.s32.totalorder %s128, %s129
    %p140 = scmp.eq.s32.totalorder %s15, 0
    %p141 = por %p139, %p140
    %p142 = scmp.ne.s32.totalorder %s128, %s129
    %p143 = scmp.eq.s32.totalorder %s16, 7
    %p144 = por %p142, %p143
    %p146 = scmp.ne.s32.totalorder %s129, %s145
    %p147 = scmp.eq.s32.totalorder %s16, 0
    %p148 = por %p146, %p147
    %p149 = scmp.le.s32.totalorder 1, %s10
    %p150 = scmp.lt.s32.totalorder %s10, 9
    %p151 = pnand %p149, %p150
    %p152 = pneg %p151
    // Predicated region
    $region9: #{transition_block.1} parent=5 // pred_check
      _
    $region10: #{transition_block.1} parent=5 // pred_check_branch
      %154 = sbr.rel (%p151) target = $region12
    $region11: #{transition_block.1} parent=5 // pred_region
      %s155 = ssub.s32 %s10, 1
      // Predicated region
      $region13: #{transition_block.1} parent=11 // pred_check
        %p156 = pneg %p71
      $region14: #{transition_block.1} parent=11 // pred_check_branch
        %158 = sbr.rel (%p156) target = $region16
      $region15: #{transition_block.1} parent=11 // pred_region
        _
      $region16: #{transition_block.1} parent=11 // pred_fallthru
        _
      // Predicated region
      $region17: #{transition_block.1} parent=11 // pred_check
        %p159 = pneg %p92
      $region18: #{transition_block.1} parent=11 // pred_check_branch
        %161 = sbr.rel (%p159) target = $region20
      $region19: #{transition_block.1} parent=11 // pred_region
        _
      $region20: #{transition_block.1} parent=11 // pred_fallthru
        _
      // Predicated region
      $region21: #{transition_block.1} parent=11 // pred_check
        %p162 = pneg %p113
      $region22: #{transition_block.1} parent=11 // pred_check_branch
        %164 = sbr.rel (%p162) target = $region24
      $region23: #{transition_block.1} parent=11 // pred_region
        _
      $region24: #{transition_block.1} parent=11 // pred_fallthru
        _
    $region12: #{transition_block.1} parent=5 // pred_fallthru
      _
    %p165 = scmp.lt.s32.totalorder %s10, 8
    // Predicated region
    $region25: #{transition_block.1} parent=5 // pred_check
      %p166 = pneg %p165
    $region26: #{transition_block.1} parent=5 // pred_check_branch
      %168 = sbr.rel (%p166) target = $region28
    $region27: #{transition_block.1} parent=5 // pred_region
      // Predicated region
      $region29: #{transition_block.1} parent=27 // pred_check
        %p169 = pneg %p44
      $region30: #{transition_block.1} parent=27 // pred_check_branch
        %171 = sbr.rel (%p169) target = $region32
      $region31: #{transition_block.1} parent=27 // pred_region
        %s172 = smul.u32 2, %s18
        %p173 = scmp.lt.s32.totalorder %s17, 1
        %s174 = scalar_select %p173, %s17, 1
        %p175 = scmp.lt.s32.totalorder %s172, 7
        %s176 = scalar_select %p175, %s172, 7
        %s177 = smul.addr %s176, 4
        %s178 = smul.addr %s174, 32
        %s179 = sadd.s32 %s177, %s178
        %s180 = smul.addr %s179, 8
        %s181 = scalar_lea.vmem %s0, %s180
        %s182 = smul.u32 2, %s18
      $region32: #{transition_block.1} parent=27 // pred_fallthru
        _
    $region28: #{transition_block.1} parent=5 // pred_fallthru
      _
    %p183 = scmp.le.s32.totalorder 1, %s10
    %p184 = scmp.lt.s32.totalorder %s10, 9
    %p185 = pnand %p183, %p184
    %p186 = pneg %p185
    // Predicated region
    $region33: #{transition_block.1} parent=5 // pred_check
      _
    $region34: #{transition_block.1} parent=5 // pred_check_branch
      %188 = sbr.rel (%p185) target = $region36
    $region35: #{transition_block.1} parent=5 // pred_region
      %s189 = ssub.s32 %s10, 1
      %s190 = smul.u32 2, %s20
      %p191 = scmp.lt.s32.totalorder %s19, 1
      %s192 = scalar_select %p191, %s19, 1
      %p193 = scmp.lt.s32.totalorder %s190, 7
      %s194 = scalar_select %p193, %s190, 7
      %s195 = smul.addr %s194, 4
      %s196 = smul.addr %s192, 32
      %s197 = sadd.s32 %s195, %s196
      %s198 = smul.addr %s197, 8
      %s199 = scalar_lea.vmem %s0, %s198
      %p200 = pneg %p50
      %p201 = pneg %p47
      %p202 = pneg %p71
      %p203 = pneg %p68
      %p204 = pneg %p92
      %p205 = pneg %p89
      %p206 = pneg %p113
      %p207 = pneg %p110
      %p208 = pneg %p141
      %p209 = pneg %p138
      %s210 = smul.u32 2, %s20
      %p211 = scmp.lt.s32.totalorder %s19, 1
      %s212 = scalar_select %p211, %s19, 1
      %p213 = scmp.lt.s32.totalorder %s210, 7
      %s214 = scalar_select %p213, %s210, 7
      %s215 = smul.addr %s212, 8
      %s216 = sadd.s32 %s214, %s215
      %s217 = smul.addr %s216, 8
      %s218 = scalar_lea.vmem %s4, %s217
      %s219 = smul.u32 2, %s20
      %p220 = scmp.lt.s32.totalorder %s19, 1
      %s221 = scalar_select %p220, %s19, 1
      %p222 = scmp.lt.s32.totalorder %s219, 7
      %s223 = scalar_select %p222, %s219, 7
      %s224 = smul.addr %s223, 4
      %s225 = smul.addr %s221, 32
      %s226 = sadd.s32 %s224, %s225
      %s227 = smul.addr %s226, 8
      %s228 = scalar_lea.vmem %s0, %s227
      %s229 = smul.u32 2, %s20
      %s230 = smul.u32 2, %s20
      %p231 = scmp.lt.s32.totalorder %s19, 1
      %s232 = scalar_select %p231, %s19, 1
      %p233 = scmp.lt.s32.totalorder %s230, 7
      %s234 = scalar_select %p233, %s230, 7
      %s235 = smul.addr %s232, 8
      %s236 = sadd.s32 %s234, %s235
      %s237 = smul.addr %s236, 8
      %s238 = scalar_lea.vmem %s4, %s237
      %s239 = smul.u32 2, %s20
      %v240 = vld [vmem:[%s2] sm:$0x1]
      %v241 = vld [vmem:[%s3] sm:$0x1]
      %v242 = vld [vmem:[%s228] sm:$0xff]
      %v243 = vld [vmem:[%s228 + $0x8] sm:$0xff]
      %v244 = vld [vmem:[%s228 + $0x10] sm:$0xff]
      %v245 = vld [vmem:[%s228 + $0x18] sm:$0xff]
      %v246 = vld [vmem:[%s228 + $0x20] sm:$0xff]
      %v247 = vld [vmem:[%s228 + $0x28] sm:$0xff]
      %v248 = vld [vmem:[%s228 + $0x30] sm:$0xff]
      %v249 = vld [vmem:[%s228 + $0x38] sm:$0xff]
      %v251 = vperm.slane %v240, 0
      %v253 = vmul.f32 %v242, %v251
      %v254 = vmul.f32 %v243, %v251
      %v255 = vmul.f32 %v244, %v251
      %v256 = vmul.f32 %v245, %v251
      %v257 = vmul.f32 %v246, %v251
      %v258 = vmul.f32 %v247, %v251
      %v259 = vmul.f32 %v248, %v251
      %v260 = vmul.f32 %v249, %v251
      %v262 = vperm.slane %v241, 0
      %v264 = vadd.f32 %v253, %v262
      %v265 = vadd.f32 %v254, %v262
      %v266 = vadd.f32 %v255, %v262
      %v267 = vadd.f32 %v256, %v262
      %v268 = vadd.f32 %v257, %v262
      %v269 = vadd.f32 %v258, %v262
      %v270 = vadd.f32 %v259, %v262
      %v271 = vadd.f32 %v260, %v262
      %v272 = vmax.f32 %v264, 0.0
      %v273 = vmax.f32 %v265, 0.0
      %v274 = vmax.f32 %v266, 0.0
      %v275 = vmax.f32 %v267, 0.0
      %v276 = vmax.f32 %v268, 0.0
      %v277 = vmax.f32 %v269, 0.0
      %v278 = vmax.f32 %v270, 0.0
      %v279 = vmax.f32 %v271, 0.0
      %vm280 = vcmask 31744
      %v281 = vsel %vm280, %v272, 0.0
      %v282 = vsel %vm280, %v273, 0.0
      %v283 = vadd.f32 %v281, %v282
      %v284 = vsel %vm280, %v274, 0.0
      %v285 = vadd.f32 %v283, %v284
      %v286 = vsel %vm280, %v275, 0.0
      %v287 = vadd.f32 %v285, %v286
      %v288 = vsel %vm280, %v276, 0.0
      %v289 = vsel %vm280, %v277, 0.0
      %v290 = vadd.f32 %v288, %v289
      %v291 = vsel %vm280, %v278, 0.0
      %v292 = vadd.f32 %v290, %v291
      %v293 = vsel %vm280, %v279, 0.0
      %v294 = vadd.f32 %v292, %v293
      %v295 = vld [vmem:[%s1] sm:$0xf]
      %v297 = vsel %vm280, %v287, 0
      %v300 = vsel %vm280, %v294, 0
      %vm302 = vcmask 1043456
      %v304 = vsel %vm302, %v295, 0
      %306 = vmatpush.msra.mxu0 0.0
      %307 = vmatpush.msra.mxu0 0.0
      %308 = vmatpush.msra.mxu0 0.0
      %309 = vmatpush.msra.mxu0 0.0
      %310 = vmatpush.msra.mxu0 0.0
      %311 = vmatpush.msra.mxu0 0.0
      %312 = vmatpush.msra.mxu0 0.0
      %313 = vmatpush.msra.mxu0 0.0
      %314 = vmatpush.msra.mxu0 0.0
      %315 = vmatpush.msra.mxu0 0.0
      %316 = vmatpush.msra.mxu0 0.0
      %317 = vmatpush.msra.mxu0 0.0
      %318 = vmatpush.msra.mxu0 0.0
      %319 = vmatpush.msra.mxu0 0.0
      %320 = vmatpush.msra.mxu0 0.0
      %321 = vmatpush.msra.mxu0 %v304
      %322 = vmatmul.f32.gmra.mxu0 %v297
      %v323 = vpop.f32.mrf.mxu0
      %v324 = vadd.f32 0.0, %v323
      %325 = vmatmul.f32.gmra.mxu0 %v300
      %v326 = vpop.f32.mrf.mxu0
      %v327 = vadd.f32 0.0, %v326
      %328 = vdwg.mxu0
      %vm329 = vcmask 15360
      %330 = vst.msk [vmem:[%s238] sm:$0xff] %vm329, %v324
      %331 = vst.msk [vmem:[%s238 + $0x8] sm:$0xff] %vm329, %v327
      %s332 = smul.u32 2, %s20
      %p333 = scmp.lt.s32.totalorder %s19, 1
      %s334 = scalar_select %p333, %s19, 1
      %p335 = scmp.lt.s32.totalorder %s332, 7
      %s336 = scalar_select %p335, %s332, 7
      %s337 = smul.addr %s334, 8
      %s338 = sadd.s32 %s336, %s337
      %s339 = smul.addr %s338, 8
      %s340 = scalar_lea.vmem %s4, %s339
      // Predicated region
      $region37: #{transition_block.1} parent=35 // pred_check
        %p341 = pneg %p138
      $region38: #{transition_block.1} parent=35 // pred_check_branch
        %343 = sbr.rel (%p341) target = $region40
      $region39: #{transition_block.1} parent=35 // pred_region
        %s344 = smul.u32 2, %s20
      $region40: #{transition_block.1} parent=35 // pred_fallthru
        _
    $region36: #{transition_block.1} parent=5 // pred_fallthru
      _
    %p345 = scmp.le.s32.totalorder 2, %s10
    // Predicated region
    $region41: #{transition_block.1} parent=5 // pred_check
      %p346 = pneg %p345
    $region42: #{transition_block.1} parent=5 // pred_check_branch
      %348 = sbr.rel (%p346) target = $region44
    $region43: #{transition_block.1} parent=5 // pred_region
      %s349 = ssub.s32 %s10, 2
      // Predicated region
      $region45: #{transition_block.1} parent=43 // pred_check
        %p350 = pneg %p144
      $region46: #{transition_block.1} parent=43 // pred_check_branch
        %352 = sbr.rel (%p350) target = $region48
      $region47: #{transition_block.1} parent=43 // pred_region
        %s353 = smul.u32 2, %s22
        %p354 = scmp.lt.s32.totalorder %s21, 1
        %s355 = scalar_select %p354, %s21, 1
        %p356 = scmp.lt.s32.totalorder %s353, 7
        %s357 = scalar_select %p356, %s353, 7
        %s358 = smul.addr %s355, 8
        %s359 = sadd.s32 %s357, %s358
        %s360 = smul.addr %s359, 8
        %s361 = scalar_lea.vmem %s4, %s360
      $region48: #{transition_block.1} parent=43 // pred_fallthru
        _
    $region44: #{transition_block.1} parent=5 // pred_fallthru
      _
  $region6: #{transition_block.1} parent=0 // loop_footer
    %s14 = sadd.s32 1, %s10
  $region7: #{transition_block.1} parent=0 // loop_footer_branch
    %9 = sbr.rel target = $region3
  $region8: #{transition_block.1} parent=0 // loop_exit
    _

</llo_original>
